<compile_context>
chip_gen: v7x
topology: tpu7x:2x2x1
jax: 0.10.0
libtpu: 0.0.40
codegen_flags: <defaults>
</compile_context>

<pallas_src>
import functools

import numpy as np
import jax
import jax.numpy as jnp
from jax.experimental import pallas as pl
from jax.experimental.pallas import tpu as pltpu


# ---------------------------------------------------------------------------
# Host-side 1-D interpolation weight matrices (static sizes, match PyTorch).
# ---------------------------------------------------------------------------
def _nearest_weights(out_size: int, in_size: int) -> np.ndarray:
    # PyTorch 'nearest': src = floor(dst * in / out)
    dst = np.arange(out_size)
    src = np.clip(np.floor(dst * (in_size / out_size)).astype(np.int64),
                  0, in_size - 1)
    w = np.zeros((out_size, in_size), dtype=np.float32)
    w[dst, src] = 1.0
    return w


def _bilinear_weights(out_size: int, in_size: int) -> np.ndarray:
    # PyTorch 'bilinear', align_corners=False (default):
    #   src = max((dst + 0.5) * (in/out) - 0.5, 0)
    scale = in_size / out_size
    dst = np.arange(out_size)
    src = np.maximum((dst + 0.5) * scale - 0.5, 0.0)
    lo = np.clip(np.floor(src).astype(np.int64), 0, in_size - 1)
    hi = np.minimum(lo + 1, in_size - 1)
    w_hi = (src - lo).astype(np.float32)
    w_lo = 1.0 - w_hi
    w = np.zeros((out_size, in_size), dtype=np.float32)
    np.add.at(w, (dst, lo), w_lo)
    np.add.at(w, (dst, hi), w_hi)
    return w


def _make_weights(mode: str, out_size: int, in_size: int) -> np.ndarray:
    if mode == "nearest":
        return _nearest_weights(out_size, in_size)
    if mode in ("bilinear", "linear"):
        return _bilinear_weights(out_size, in_size)
    # TODO(synk): 'bicubic'/'area' are not expressible with these separable weights.
    raise NotImplementedError(f"mode {mode!r} not supported")


# ---------------------------------------------------------------------------
# Pure-JAX reference (same separable formulation, f32 weights).  Also used as
# the fallback for spatial maps whose kron weight would not fit in VMEM.
# ---------------------------------------------------------------------------
def _interpolate_ref(x, size, mode):
    if isinstance(size, int):
        size = (size, size)
    h_out, w_out = int(size[0]), int(size[1])
    _, _, h_in, w_in = x.shape
    wh = jnp.asarray(_make_weights(mode, h_out, h_in))
    ww = jnp.asarray(_make_weights(mode, w_out, w_in))
    return jnp.einsum("oi,ncij,pj->ncop", wh, x.astype(jnp.float32), ww).astype(x.dtype)


# ---------------------------------------------------------------------------
# Generation-aware VMEM limit (v7x: 64 MiB physical -> 48 MiB limit,
# v5e/v6e: 128 MiB physical -> 96 MiB limit).
# ---------------------------------------------------------------------------
def _vmem_limit_bytes() -> int:
    try:
        phys = int(pltpu.get_tpu_info().vmem_capacity_bytes)
    except Exception:
        phys = 64 << 20  # conservative default (matches v7x per-core VMEM)
    return int(min((phys * 3) // 4, 96 << 20))


# ---------------------------------------------------------------------------
# Row-tile picker for the fused N*C axis.
#   Accounts for: double-buffered input/output blocks, the single-buffered
#   kron weight, and the f32 matmul result before the output cast.
#   Row tiles are multiples of the dtype sublane alignment (8 f32 / 16 bf16)
#   or full-extent, so the BlockSpec is always layout-legal.
# ---------------------------------------------------------------------------
def _pick_row_tile(b, k, nout, x_bytes, w_bytes, budget_bytes, align,
                   target_rows=1024):
    weight_bytes = k * nout * w_bytes                      # pl.Buffered(1) -> counted once
    per_row = (2 * k + 2 * nout) * x_bytes + 4 * nout      # dbl-buffered blocks + f32 acc
    avail = budget_bytes - weight_bytes
    cap = max(int(avail // per_row), align) if avail > 0 else align
    bt = min(b, cap, target_rows)
    if bt >= b:
        return b                                           # full extent: always legal
    bt = max((bt // align) * align, align)
    # Prefer an exact divisor of b so the final block is not partial.
    for cand in range(bt, align - 1, -align):
        if b % cand == 0:
            return cand
    return bt


# ---------------------------------------------------------------------------
# Pallas kernel: one rank-2 MXU matmul per grid step.
#   x_ref : (Bt, H_in*W_in)            -- Bt fused (n, c) planes (rows)
#   w_ref : (H_in*W_in, H_out*W_out)   -- kron(Wh, Ww)^T, constant across steps
#   o_ref : (Bt, H_out*W_out)          -- lane-dense output block
# ---------------------------------------------------------------------------
def _kron_interp_kernel(x_ref, w_ref, o_ref, *, compute_dtype):
    x = x_ref[...].astype(compute_dtype)
    out = jnp.dot(x, w_ref[...], preferred_element_type=jnp.float32)
    o_ref[...] = out.astype(o_ref.dtype)


@functools.partial(jax.jit, static_argnames=("size", "mode"))
def interpolate(x: jax.Array, size, mode: str = "nearest") -> jax.Array:
    """Pallas equivalent of torch.nn.functional.interpolate(x, size, mode).

    x: (N, C, H_in, W_in) -> (N, C, H_out, W_out), NCHW like the PyTorch module.
    """
    if isinstance(size, int):
        size = (int(size), int(size))
    h_out, w_out = int(size[0]), int(size[1])
    n, c, h_in, w_in = x.shape
    b = n * c
    k = h_in * w_in
    nout = h_out * w_out

    # bf16 inputs use bf16 weights (bf16 MXU fast path; exact for one-hot
    # 'nearest' weights, ~1e-3 rel for bilinear).  Accumulation stays f32.
    compute_dtype = jnp.bfloat16 if x.dtype == jnp.bfloat16 else jnp.float32
    x_bytes = jnp.dtype(x.dtype).itemsize
    w_bytes = jnp.dtype(compute_dtype).itemsize
    align = 16 if x_bytes < 4 else 8           # bf16 packs two rows per sublane

    vmem_limit = _vmem_limit_bytes()
    tile_budget = vmem_limit // 2              # headroom for Mosaic internals

    weight_bytes = k * nout * w_bytes
    if weight_bytes > tile_budget // 2:
        # TODO(synk): Pallas separable two-pass path for very large maps
        # (W_out >= 128); XLA separable einsum fallback for now.
        return _interpolate_ref(x, size, mode)

    wh = _make_weights(mode, h_out, h_in)                  # (H_out, H_in)
    ww = _make_weights(mode, w_out, w_in)                  # (W_out, W_in)
    # Full separable lift: one lane-dense matmul per tile of planes.
    wt = jnp.asarray(np.kron(wh, ww).T, dtype=compute_dtype)   # (K, Nout)

    # Free, row-major reshape: NCHW -> (N*C, H_in*W_in).  No HBM transpose.
    x2 = x.reshape(b, k)

    bt = _pick_row_tile(b, k, nout, x_bytes, w_bytes, tile_budget, align)
    nb = pl.cdiv(b, bt)

    flops = 2 * b * k * nout
    bytes_accessed = b * (k + nout) * x_bytes + weight_bytes

    out2 = pl.pallas_call(
        functools.partial(_kron_interp_kernel, compute_dtype=compute_dtype),
        out_shape=jax.ShapeDtypeStruct((b, nout), x.dtype),
        grid_spec=pltpu.PrefetchScalarGridSpec(
            num_scalar_prefetch=0,
            grid=(nb,),
            in_specs=[
                pl.BlockSpec((bt, k), lambda j: (j, 0)),
                # Constant-index weight: single-buffered, fetched once.
                pl.BlockSpec((k, nout), lambda j: (0, 0),
                             pipeline_mode=pl.Buffered(1)),
            ],
            out_specs=pl.BlockSpec((bt, nout), lambda j: (j, 0)),
        ),
        compiler_params=pltpu.CompilerParams(
            dimension_semantics=("parallel",),
            vmem_limit_bytes=int(vmem_limit),
        ),
        cost_estimate=pl.CostEstimate(
            flops=int(flops), transcendentals=0,
            bytes_accessed=int(bytes_accessed)),
    )(x2, wt)

    # Free reshape back to NCHW.
    return out2.reshape(n, c, h_out, w_out)


if __name__ == "__main__":
    key = jax.random.PRNGKey(0)
    # Small shapes consistent with a conv-AE decoder feature map.
    x = jax.random.normal(key, (2, 4, 16, 16), dtype=jnp.float32)

    # Interpolate(size=32, mode='bilinear')
    out_bi = jax.block_until_ready(interpolate(x, size=32, mode="bilinear"))
    assert out_bi.shape == (2, 4, 32, 32), out_bi.shape
    ref_bi = _interpolate_ref(x, 32, "bilinear")
    np.testing.assert_allclose(np.asarray(out_bi), np.asarray(ref_bi),
                               rtol=1e-4, atol=1e-5)

    # Interpolate(size=32, mode='nearest')
    out_nn = jax.block_until_ready(interpolate(x, size=32, mode="nearest"))
    assert out_nn.shape == (2, 4, 32, 32), out_nn.shape
    ref_nn = _interpolate_ref(x, 32, "nearest")
    np.testing.assert_allclose(np.asarray(out_nn), np.asarray(ref_nn),
                               rtol=1e-5, atol=1e-5)

    print("KERNEL_OK")
</pallas_src>

<mosaic_0001>
module attributes {stable_mosaic.version = 11 : i64} {
  func.func @_kron_interp_kernel(%arg0: i32, %arg1: memref<8x256xf32, #tpu.memory_space<vmem>>, %arg2: memref<256x1024xf32, #tpu.memory_space<vmem>>, %arg3: memref<8x1024xf32, #tpu.memory_space<vmem>>) attributes {dimension_semantics = [#tpu.dimension_semantics<parallel>], iteration_bounds = array<i64: 1>, scalar_prefetch = 0 : i64, scratch_operands = 0 : i64, tpu.core_type = #tpu.core_type<tc>, window_params = [{transform_indices = @transform_0, window_bounds = array<i64: 8, 256>}, {pipeline_mode = #tpu.pipeline_mode<synchronous>, transform_indices = @transform_1, window_bounds = array<i64: 256, 1024>}, {transform_indices = @transform_2, window_bounds = array<i64: 8, 1024>}]} {
    %c0 = arith.constant 0 : index
    %c0_0 = arith.constant 0 : index
    %0 = vector.load %arg1[%c0, %c0_0] : memref<8x256xf32, #tpu.memory_space<vmem>>, vector<8x256xf32>
    %c0_1 = arith.constant 0 : index
    %c0_2 = arith.constant 0 : index
    %1 = vector.load %arg2[%c0_1, %c0_2] : memref<256x1024xf32, #tpu.memory_space<vmem>>, vector<256x1024xf32>
    %cst = arith.constant dense<0.000000e+00> : vector<8x1024xf32>
    %2 = tpu.matmul %0, %1, %cst {dimension_numbers = #tpu.dot_dimension_numbers<[1], [0], [0], [1], [0, 0, 1, 1], [], []>} : vector<8x256xf32>, vector<256x1024xf32>, vector<8x1024xf32> -> vector<8x1024xf32>
    %c0_3 = arith.constant 0 : index
    %c0_4 = arith.constant 0 : index
    %3 = vector.load %arg3[%c0_3, %c0_4] : memref<8x1024xf32, #tpu.memory_space<vmem>>, vector<8x1024xf32>
    tpu.vector_store %arg3[%c0_3, %c0_4], %2 {strides = array<i32>} : memref<8x1024xf32, #tpu.memory_space<vmem>>, vector<8x1024xf32>,
    return
  }
  func.func @transform_0(%arg0: i32) -> (i32, i32) {
    %c0_i32 = arith.constant 0 : i32
    %c0_i32_0 = arith.constant 0 : i32
    return %arg0, %c0_i32 : i32, i32
  }
  func.func @transform_1(%arg0: i32) -> (i32, i32) {
    %c0_i32 = arith.constant 0 : i32
    %c0_i32_0 = arith.constant 0 : i32
    %c0_i32_1 = arith.constant 0 : i32
    return %c0_i32, %c0_i32_0 : i32, i32
  }
  func.func @transform_2(%arg0: i32) -> (i32, i32) {
    %c0_i32 = arith.constant 0 : i32
    %c0_i32_0 = arith.constant 0 : i32
    return %arg0, %c0_i32 : i32, i32
  }
}

</mosaic_0001>

<llo_original>
// kernel: interpolate.1
$region0: #{interpolate.1}
  #allocation0 [shape = 'u32[]', space=smem, size = 0x4, offset = 0x4, fixed_abs, tag = 'smem constant byte address 0x4 - core index']
  #allocation1 [shape = 'u32[144,128]{1,0:T(1,128)}', space=vmem, size = 0x12000, scoped, tag = 'internal scratch']
  %s0 = inlined_call_operand.vmem [shape: f32[8,256], index: 0, kind: input, shape index: {}]
  %s1 = inlined_call_operand.hbm [shape: f32[256,1024], index: 1, kind: input, shape index: {}]
  %s2 = inlined_call_operand.vmem [shape: f32[8,1024], index: 2, kind: output, shape index: {}]
  %s3 = sld [smem:[#allocation0]]
  $region22: #{interpolate.1} parent=0
    _
  %s5 = ssub.s32 1, %s3
  %s6 = scalar_select 0, %s5, %s3
  $region1: #{interpolate.1} parent=0
    #allocation2 [shape = 'u8[1048576]{0}', space=vmem, size = 0x100000, scoped, tag = 'input window, operand 1, single buffered']
    #allocation3 [shape = 's32[1]{0}', space=sflag, size = 0x4, scoped, tag = 'scoped memory for interpolate.1']
    %7 = vsyncpa [#allocation3], 0
    // Predicated region
    $region2: #{interpolate.1} parent=1 // pred_check
      _
    $region3: #{interpolate.1} parent=1 // pred_check_branch
      %9 = sbr.rel (0) target = $region5
    $region4: #{interpolate.1} parent=1 // pred_region
      _
    $region5: #{interpolate.1} parent=1 // pred_fallthru
      _
    // Predicated region
    $region6: #{interpolate.1} parent=1 // pred_check
      _
    $region7: #{interpolate.1} parent=1 // pred_check_branch
      %11 = sbr.rel (0) target = $region9
    $region8: #{interpolate.1} parent=1 // pred_region
      %s13 = ssub.s32 32768, 32768
      %14 = vsyncadd [#allocation3], %s13
      %s15 = sshll.u32 [#allocation2], 4
      %s16 = int_to_ptr.vmem [resolvable:$true] %s15
      %21 = dma.hbm_to_vmem [thread:$0]  %s1, 32768, %s16, [#allocation3], 1024, 1024, 64
    $region9: #{interpolate.1} parent=1 // pred_fallthru
      _
    // Predicated region
    $region10: #{interpolate.1} parent=1 // pred_check
      _
    $region11: #{interpolate.1} parent=1 // pred_check_branch
      %23 = sbr.rel (0) target = $region13
    $region12: #{interpolate.1} parent=1 // pred_region
      %24 = dma.done [#allocation3], 32768
    $region13: #{interpolate.1} parent=1 // pred_fallthru
      _
    %v25 = vld [vmem:[%s0] sm:$0xff]
    %v26 = vld [vmem:[%s0 + $0x8] sm:$0xff]
    %v27 = vld [vmem:[#allocation2] sm:$0xff]
    %v28 = vld [vmem:[#allocation2 + $0x8] sm:$0xff]
    %v29 = vld [vmem:[#allocation2 + $0x10] sm:$0xff]
    %v30 = vld [vmem:[#allocation2 + $0x18] sm:$0xff]
    %v31 = vld [vmem:[#allocation2 + $0x20] sm:$0xff]
    %v32 = vld [vmem:[#allocation2 + $0x28] sm:$0xff]
    %v33 = vld [vmem:[#allocation2 + $0x30] sm:$0xff]
    %v34 = vld [vmem:[#allocation2 + $0x38] sm:$0xff]
    %v35 = vld [vmem:[#allocation2 + $0x40] sm:$0xff]
    %v36 = vld [vmem:[#allocation2 + $0x48] sm:$0xff]
    %v37 = vld [vmem:[#allocation2 + $0x50] sm:$0xff]
    %v38 = vld [vmem:[#allocation2 + $0x58] sm:$0xff]
    %v39 = vld [vmem:[#allocation2 + $0x60] sm:$0xff]
    %v40 = vld [vmem:[#allocation2 + $0x68] sm:$0xff]
    %v41 = vld [vmem:[#allocation2 + $0x70] sm:$0xff]
    %v42 = vld [vmem:[#allocation2 + $0x78] sm:$0xff]
    %v43 = vld [vmem:[#allocation2 + $0x80] sm:$0xff]
    %v44 = vld [vmem:[#allocation2 + $0x88] sm:$0xff]
    %v45 = vld [vmem:[#allocation2 + $0x90] sm:$0xff]
    %v46 = vld [vmem:[#allocation2 + $0x98] sm:$0xff]
    %v47 = vld [vmem:[#allocation2 + $0xa0] sm:$0xff]
    %v48 = vld [vmem:[#allocation2 + $0xa8] sm:$0xff]
    %v49 = vld [vmem:[#allocation2 + $0xb0] sm:$0xff]
    %v50 = vld [vmem:[#allocation2 + $0xb8] sm:$0xff]
    %v51 = vld [vmem:[#allocation2 + $0xc0] sm:$0xff]
    %v52 = vld [vmem:[#allocation2 + $0xc8] sm:$0xff]
    %v53 = vld [vmem:[#allocation2 + $0xd0] sm:$0xff]
    %v54 = vld [vmem:[#allocation2 + $0xd8] sm:$0xff]
    %v55 = vld [vmem:[#allocation2 + $0xe0] sm:$0xff]
    %v56 = vld [vmem:[#allocation2 + $0xe8] sm:$0xff]
    %v57 = vld [vmem:[#allocation2 + $0xf0] sm:$0xff]
    %v58 = vld [vmem:[#allocation2 + $0xf8] sm:$0xff]
    %v59 = vld [vmem:[#allocation2 + $0x100] sm:$0xff]
    %v60 = vld [vmem:[#allocation2 + $0x108] sm:$0xff]
    %v61 = vld [vmem:[#allocation2 + $0x110] sm:$0xff]
    %v62 = vld [vmem:[#allocation2 + $0x118] sm:$0xff]
    %v63 = vld [vmem:[#allocation2 + $0x120] sm:$0xff]
    %v64 = vld [vmem:[#allocation2 + $0x128] sm:$0xff]
    %v65 = vld [vmem:[#allocation2 + $0x130] sm:$0xff]
    %v66 = vld [vmem:[#allocation2 + $0x138] sm:$0xff]
    %v67 = vld [vmem:[#allocation2 + $0x140] sm:$0xff]
    %v68 = vld [vmem:[#allocation2 + $0x148] sm:$0xff]
    %v69 = vld [vmem:[#allocation2 + $0x150] sm:$0xff]
    %v70 = vld [vmem:[#allocation2 + $0x158] sm:$0xff]
    %v71 = vld [vmem:[#allocation2 + $0x160] sm:$0xff]
    %v72 = vld [vmem:[#allocation2 + $0x168] sm:$0xff]
    %v73 = vld [vmem:[#allocation2 + $0x170] sm:$0xff]
    %v74 = vld [vmem:[#allocation2 + $0x178] sm:$0xff]
    %v75 = vld [vmem:[#allocation2 + $0x180] sm:$0xff]
    %v76 = vld [vmem:[#allocation2 + $0x188] sm:$0xff]
    %v77 = vld [vmem:[#allocation2 + $0x190] sm:$0xff]
    %v78 = vld [vmem:[#allocation2 + $0x198] sm:$0xff]
    %v79 = vld [vmem:[#allocation2 + $0x1a0] sm:$0xff]
    %v80 = vld [vmem:[#allocation2 + $0x1a8] sm:$0xff]
    %v81 = vld [vmem:[#allocation2 + $0x1b0] sm:$0xff]
    %v82 = vld [vmem:[#allocation2 + $0x1b8] sm:$0xff]
    %v83 = vld [vmem:[#allocation2 + $0x1c0] sm:$0xff]
    %v84 = vld [vmem:[#allocation2 + $0x1c8] sm:$0xff]
    %v85 = vld [vmem:[#allocation2 + $0x1d0] sm:$0xff]
    %v86 = vld [vmem:[#allocation2 + $0x1d8] sm:$0xff]
    %v87 = vld [vmem:[#allocation2 + $0x1e0] sm:$0xff]
    %v88 = vld [vmem:[#allocation2 + $0x1e8] sm:$0xff]
    %v89 = vld [vmem:[#allocation2 + $0x1f0] sm:$0xff]
    %v90 = vld [vmem:[#allocation2 + $0x1f8] sm:$0xff]
    %v91 = vld [vmem:[#allocation2 + $0x200] sm:$0xff]
    %v92 = vld [vmem:[#allocation2 + $0x208] sm:$0xff]
    %v93 = vld [vmem:[#allocation2 + $0x210] sm:$0xff]
    %v94 = vld [vmem:[#allocation2 + $0x218] sm:$0xff]
    %v95 = vld [vmem:[#allocation2 + $0x220] sm:$0xff]
    %v96 = vld [vmem:[#allocation2 + $0x228] sm:$0xff]
    %v97 = vld [vmem:[#allocation2 + $0x230] sm:$0xff]
    %v98 = vld [vmem:[#allocation2 + $0x238] sm:$0xff]
    %v99 = vld [vmem:[#allocation2 + $0x240] sm:$0xff]
    %v100 = vld [vmem:[#allocation2 + $0x248] sm:$0xff]
    %v101 = vld [vmem:[#allocation2 + $0x250] sm:$0xff]
    %v102 = vld [vmem:[#allocation2 + $0x258] sm:$0xff]
    %v103 = vld [vmem:[#allocation2 + $0x260] sm:$0xff]
    %v104 = vld [vmem:[#allocation2 + $0x268] sm:$0xff]
    %v105 = vld [vmem:[#allocation2 + $0x270] sm:$0xff]
    %v106 = vld [vmem:[#allocation2 + $0x278] sm:$0xff]
    %v107 = vld [vmem:[#allocation2 + $0x280] sm:$0xff]
    %v108 = vld [vmem:[#allocation2 + $0x288] sm:$0xff]
    %v109 = vld [vmem:[#allocation2 + $0x290] sm:$0xff]
    %v110 = vld [vmem:[#allocation2 + $0x298] sm:$0xff]
    %v111 = vld [vmem:[#allocation2 + $0x2a0] sm:$0xff]
    %v112 = vld [vmem:[#allocation2 + $0x2a8] sm:$0xff]
    %v113 = vld [vmem:[#allocation2 + $0x2b0] sm:$0xff]
    %v114 = vld [vmem:[#allocation2 + $0x2b8] sm:$0xff]
    %v115 = vld [vmem:[#allocation2 + $0x2c0] sm:$0xff]
    %v116 = vld [vmem:[#allocation2 + $0x2c8] sm:$0xff]
    %v117 = vld [vmem:[#allocation2 + $0x2d0] sm:$0xff]
    %v118 = vld [vmem:[#allocation2 + $0x2d8] sm:$0xff]
    %v119 = vld [vmem:[#allocation2 + $0x2e0] sm:$0xff]
    %v120 = vld [vmem:[#allocation2 + $0x2e8] sm:$0xff]
    %v121 = vld [vmem:[#allocation2 + $0x2f0] sm:$0xff]
    %v122 = vld [vmem:[#allocation2 + $0x2f8] sm:$0xff]
    %v123 = vld [vmem:[#allocation2 + $0x300] sm:$0xff]
    %v124 = vld [vmem:[#allocation2 + $0x308] sm:$0xff]
    %v125 = vld [vmem:[#allocation2 + $0x310] sm:$0xff]
    %v126 = vld [vmem:[#allocation2 + $0x318] sm:$0xff]
    %v127 = vld [vmem:[#allocation2 + $0x320] sm:$0xff]
    %v128 = vld [vmem:[#allocation2 + $0x328] sm:$0xff]
    %v129 = vld [vmem:[#allocation2 + $0x330] sm:$0xff]
    %v130 = vld [vmem:[#allocation2 + $0x338] sm:$0xff]
    %v131 = vld [vmem:[#allocation2 + $0x340] sm:$0xff]
    %v132 = vld [vmem:[#allocation2 + $0x348] sm:$0xff]
    %v133 = vld [vmem:[#allocation2 + $0x350] sm:$0xff]
    %v134 = vld [vmem:[#allocation2 + $0x358] sm:$0xff]
    %v135 = vld [vmem:[#allocation2 + $0x360] sm:$0xff]
    %v136 = vld [vmem:[#allocation2 + $0x368] sm:$0xff]
    %v137 = vld [vmem:[#allocation2 + $0x370] sm:$0xff]
    %v138 = vld [vmem:[#allocation2 + $0x378] sm:$0xff]
    %v139 = vld [vmem:[#allocation2 + $0x380] sm:$0xff]
    %v140 = vld [vmem:[#allocation2 + $0x388] sm:$0xff]
    %v141 = vld [vmem:[#allocation2 + $0x390] sm:$0xff]
    %v142 = vld [vmem:[#allocation2 + $0x398] sm:$0xff]
    %v143 = vld [vmem:[#allocation2 + $0x3a0] sm:$0xff]
    %v144 = vld [vmem:[#allocation2 + $0x3a8] sm:$0xff]
    %v145 = vld [vmem:[#allocation2 + $0x3b0] sm:$0xff]
    %v146 = vld [vmem:[#allocation2 + $0x3b8] sm:$0xff]
    %v147 = vld [vmem:[#allocation2 + $0x3c0] sm:$0xff]
    %v148 = vld [vmem:[#allocation2 + $0x3c8] sm:$0xff]
    %v149 = vld [vmem:[#allocation2 + $0x3d0] sm:$0xff]
    %v150 = vld [vmem:[#allocation2 + $0x3d8] sm:$0xff]
    %v151 = vld [vmem:[#allocation2 + $0x3e0] sm:$0xff]
    %v152 = vld [vmem:[#allocation2 + $0x3e8] sm:$0xff]
    %v153 = vld [vmem:[#allocation2 + $0x3f0] sm:$0xff]
    %v154 = vld [vmem:[#allocation2 + $0x3f8] sm:$0xff]
    %v155 = vld [vmem:[#allocation2 + $0x400] sm:$0xff]
    %v156 = vld [vmem:[#allocation2 + $0x408] sm:$0xff]
    %v157 = vld [vmem:[#allocation2 + $0x410] sm:$0xff]
    %v158 = vld [vmem:[#allocation2 + $0x418] sm:$0xff]
    %v159 = vld [vmem:[#allocation2 + $0x420] sm:$0xff]
    %v160 = vld [vmem:[#allocation2 + $0x428] sm:$0xff]
    %v161 = vld [vmem:[#allocation2 + $0x430] sm:$0xff]
    %v162 = vld [vmem:[#allocation2 + $0x438] sm:$0xff]
    %v163 = vld [vmem:[#allocation2 + $0x440] sm:$0xff]
    %v164 = vld [vmem:[#allocation2 + $0x448] sm:$0xff]
    %v165 = vld [vmem:[#allocation2 + $0x450] sm:$0xff]
    %v166 = vld [vmem:[#allocation2 + $0x458] sm:$0xff]
    %v167 = vld [vmem:[#allocation2 + $0x460] sm:$0xff]
    %v168 = vld [vmem:[#allocation2 + $0x468] sm:$0xff]
    %v169 = vld [vmem:[#allocation2 + $0x470] sm:$0xff]
    %v170 = vld [vmem:[#allocation2 + $0x478] sm:$0xff]
    %v171 = vld [vmem:[#allocation2 + $0x480] sm:$0xff]
    %v172 = vld [vmem:[#allocation2 + $0x488] sm:$0xff]
    %v173 = vld [vmem:[#allocation2 + $0x490] sm:$0xff]
    %v174 = vld [vmem:[#allocation2 + $0x498] sm:$0xff]
    %v175 = vld [vmem:[#allocation2 + $0x4a0] sm:$0xff]
    %v176 = vld [vmem:[#allocation2 + $0x4a8] sm:$0xff]
    %v177 = vld [vmem:[#allocation2 + $0x4b0] sm:$0xff]
    %v178 = vld [vmem:[#allocation2 + $0x4b8] sm:$0xff]
    %v179 = vld [vmem:[#allocation2 + $0x4c0] sm:$0xff]
    %v180 = vld [vmem:[#allocation2 + $0x4c8] sm:$0xff]
    %v181 = vld [vmem:[#allocation2 + $0x4d0] sm:$0xff]
    %v182 = vld [vmem:[#allocation2 + $0x4d8] sm:$0xff]
    %v183 = vld [vmem:[#allocation2 + $0x4e0] sm:$0xff]
    %v184 = vld [vmem:[#allocation2 + $0x4e8] sm:$0xff]
    %v185 = vld [vmem:[#allocation2 + $0x4f0] sm:$0xff]
    %v186 = vld [vmem:[#allocation2 + $0x4f8] sm:$0xff]
    %v187 = vld [vmem:[#allocation2 + $0x500] sm:$0xff]
    %v188 = vld [vmem:[#allocation2 + $0x508] sm:$0xff]
    %v189 = vld [vmem:[#allocation2 + $0x510] sm:$0xff]
    %v190 = vld [vmem:[#allocation2 + $0x518] sm:$0xff]
    %v191 = vld [vmem:[#allocation2 + $0x520] sm:$0xff]
    %v192 = vld [vmem:[#allocation2 + $0x528] sm:$0xff]
    %v193 = vld [vmem:[#allocation2 + $0x530] sm:$0xff]
    %v194 = vld [vmem:[#allocation2 + $0x538] sm:$0xff]
    %v195 = vld [vmem:[#allocation2 + $0x540] sm:$0xff]
    %v196 = vld [vmem:[#allocation2 + $0x548] sm:$0xff]
    %v197 = vld [vmem:[#allocation2 + $0x550] sm:$0xff]
    %v198 = vld [vmem:[#allocation2 + $0x558] sm:$0xff]
    %v199 = vld [vmem:[#allocation2 + $0x560] sm:$0xff]
    %v200 = vld [vmem:[#allocation2 + $0x568] sm:$0xff]
    %v201 = vld [vmem:[#allocation2 + $0x570] sm:$0xff]
    %v202 = vld [vmem:[#allocation2 + $0x578] sm:$0xff]
    %v203 = vld [vmem:[#allocation2 + $0x580] sm:$0xff]
    %v204 = vld [vmem:[#allocation2 + $0x588] sm:$0xff]
    %v205 = vld [vmem:[#allocation2 + $0x590] sm:$0xff]
    %v206 = vld [vmem:[#allocation2 + $0x598] sm:$0xff]
    %v207 = vld [vmem:[#allocation2 + $0x5a0] sm:$0xff]
    %v208 = vld [vmem:[#allocation2 + $0x5a8] sm:$0xff]
    %v209 = vld [vmem:[#allocation2 + $0x5b0] sm:$0xff]
    %v210 = vld [vmem:[#allocation2 + $0x5b8] sm:$0xff]
    %v211 = vld [vmem:[#allocation2 + $0x5c0] sm:$0xff]
    %v212 = vld [vmem:[#allocation2 + $0x5c8] sm:$0xff]
    %v213 = vld [vmem:[#allocation2 + $0x5d0] sm:$0xff]
    %v214 = vld [vmem:[#allocation2 + $0x5d8] sm:$0xff]
    %v215 = vld [vmem:[#allocation2 + $0x5e0] sm:$0xff]
    %v216 = vld [vmem:[#allocation2 + $0x5e8] sm:$0xff]
    %v217 = vld [vmem:[#allocation2 + $0x5f0] sm:$0xff]
    %v218 = vld [vmem:[#allocation2 + $0x5f8] sm:$0xff]
    %v219 = vld [vmem:[#allocation2 + $0x600] sm:$0xff]
    %v220 = vld [vmem:[#allocation2 + $0x608] sm:$0xff]
    %v221 = vld [vmem:[#allocation2 + $0x610] sm:$0xff]
    %v222 = vld [vmem:[#allocation2 + $0x618] sm:$0xff]
    %v223 = vld [vmem:[#allocation2 + $0x620] sm:$0xff]
    %v224 = vld [vmem:[#allocation2 + $0x628] sm:$0xff]
    %v225 = vld [vmem:[#allocation2 + $0x630] sm:$0xff]
    %v226 = vld [vmem:[#allocation2 + $0x638] sm:$0xff]
    %v227 = vld [vmem:[#allocation2 + $0x640] sm:$0xff]
    %v228 = vld [vmem:[#allocation2 + $0x648] sm:$0xff]
    %v229 = vld [vmem:[#allocation2 + $0x650] sm:$0xff]
    %v230 = vld [vmem:[#allocation2 + $0x658] sm:$0xff]
    %v231 = vld [vmem:[#allocation2 + $0x660] sm:$0xff]
    %v232 = vld [vmem:[#allocation2 + $0x668] sm:$0xff]
    %v233 = vld [vmem:[#allocation2 + $0x670] sm:$0xff]
    %v234 = vld [vmem:[#allocation2 + $0x678] sm:$0xff]
    %v235 = vld [vmem:[#allocation2 + $0x680] sm:$0xff]
    %v236 = vld [vmem:[#allocation2 + $0x688] sm:$0xff]
    %v237 = vld [vmem:[#allocation2 + $0x690] sm:$0xff]
    %v238 = vld [vmem:[#allocation2 + $0x698] sm:$0xff]
    %v239 = vld [vmem:[#allocation2 + $0x6a0] sm:$0xff]
    %v240 = vld [vmem:[#allocation2 + $0x6a8] sm:$0xff]
    %v241 = vld [vmem:[#allocation2 + $0x6b0] sm:$0xff]
    %v242 = vld [vmem:[#allocation2 + $0x6b8] sm:$0xff]
    %v243 = vld [vmem:[#allocation2 + $0x6c0] sm:$0xff]
    %v244 = vld [vmem:[#allocation2 + $0x6c8] sm:$0xff]
    %v245 = vld [vmem:[#allocation2 + $0x6d0] sm:$0xff]
    %v246 = vld [vmem:[#allocation2 + $0x6d8] sm:$0xff]
    %v247 = vld [vmem:[#allocation2 + $0x6e0] sm:$0xff]
    %v248 = vld [vmem:[#allocation2 + $0x6e8] sm:$0xff]
    %v249 = vld [vmem:[#allocation2 + $0x6f0] sm:$0xff]
    %v250 = vld [vmem:[#allocation2 + $0x6f8] sm:$0xff]
    %v251 = vld [vmem:[#allocation2 + $0x700] sm:$0xff]
    %v252 = vld [vmem:[#allocation2 + $0x708] sm:$0xff]
    %v253 = vld [vmem:[#allocation2 + $0x710] sm:$0xff]
    %v254 = vld [vmem:[#allocation2 + $0x718] sm:$0xff]
    %v255 = vld [vmem:[#allocation2 + $0x720] sm:$0xff]
    %v256 = vld [vmem:[#allocation2 + $0x728] sm:$0xff]
    %v257 = vld [vmem:[#allocation2 + $0x730] sm:$0xff]
    %v258 = vld [vmem:[#allocation2 + $0x738] sm:$0xff]
    %v259 = vld [vmem:[#allocation2 + $0x740] sm:$0xff]
    %v260 = vld [vmem:[#allocation2 + $0x748] sm:$0xff]
    %v261 = vld [vmem:[#allocation2 + $0x750] sm:$0xff]
    %v262 = vld [vmem:[#allocation2 + $0x758] sm:$0xff]
    %v263 = vld [vmem:[#allocation2 + $0x760] sm:$0xff]
    %v264 = vld [vmem:[#allocation2 + $0x768] sm:$0xff]
    %v265 = vld [vmem:[#allocation2 + $0x770] sm:$0xff]
    %v266 = vld [vmem:[#allocation2 + $0x778] sm:$0xff]
    %v267 = vld [vmem:[#allocation2 + $0x780] sm:$0xff]
    %v268 = vld [vmem:[#allocation2 + $0x788] sm:$0xff]
    %v269 = vld [vmem:[#allocation2 + $0x790] sm:$0xff]
    %v270 = vld [vmem:[#allocation2 + $0x798] sm:$0xff]
    %v271 = vld [vmem:[#allocation2 + $0x7a0] sm:$0xff]
    %v272 = vld [vmem:[#allocation2 + $0x7a8] sm:$0xff]
    %v273 = vld [vmem:[#allocation2 + $0x7b0] sm:$0xff]
    %v274 = vld [vmem:[#allocation2 + $0x7b8] sm:$0xff]
    %v275 = vld [vmem:[#allocation2 + $0x7c0] sm:$0xff]
    %v276 = vld [vmem:[#allocation2 + $0x7c8] sm:$0xff]
    %v277 = vld [vmem:[#allocation2 + $0x7d0] sm:$0xff]
    %v278 = vld [vmem:[#allocation2 + $0x7d8] sm:$0xff]
    %v279 = vld [vmem:[#allocation2 + $0x7e0] sm:$0xff]
    %v280 = vld [vmem:[#allocation2 + $0x7e8] sm:$0xff]
    %v281 = vld [vmem:[#allocation2 + $0x7f0] sm:$0xff]
    %v282 = vld [vmem:[#allocation2 + $0x7f8] sm:$0xff]
    %283 = vmatprep.subr.mxu0 %v28
    %284 = vmatpush1.msra.mxu0 %v27
    %285 = vmatprep.subr.mxu0 %v36
    %286 = vmatpush1.msra.mxu0 %v35
    %287 = vmatprep.subr.mxu0 %v44
    %288 = vmatpush1.msra.mxu0 %v43
    %289 = vmatprep.subr.mxu0 %v52
    %290 = vmatpush1.msra.mxu0 %v51
    %291 = vmatprep.subr.mxu0 %v60
    %292 = vmatpush1.msra.mxu0 %v59
    %293 = vmatprep.subr.mxu0 %v68
    %294 = vmatpush1.msra.mxu0 %v67
    %295 = vmatprep.subr.mxu0 %v76
    %296 = vmatpush1.msra.mxu0 %v75
    %297 = vmatprep.subr.mxu0 %v84
    %298 = vmatpush1.msra.mxu0 %v83
    %299 = vmatprep.subr.mxu0 %v92
    %300 = vmatpush1.msra.mxu0 %v91
    %301 = vmatprep.subr.mxu0 %v100
    %302 = vmatpush1.msra.mxu0 %v99
    %303 = vmatprep.subr.mxu0 %v108
    %304 = vmatpush1.msra.mxu0 %v107
    %305 = vmatprep.subr.mxu0 %v116
    %306 = vmatpush1.msra.mxu0 %v115
    %307 = vmatprep.subr.mxu0 %v124
    %308 = vmatpush1.msra.mxu0 %v123
    %309 = vmatprep.subr.mxu0 %v132
    %310 = vmatpush1.msra.mxu0 %v131
    %311 = vmatprep.subr.mxu0 %v140
    %312 = vmatpush1.msra.mxu0 %v139
    %313 = vmatprep.subr.mxu0 %v148
    %314 = vmatpush1.msra.mxu0 %v147
    %315 = vmatprep.subr.mxu0 %v156
    %316 = vmatpush1.msra.mxu0 %v155
    %317 = vmatprep.subr.mxu0 %v164
    %318 = vmatpush1.msra.mxu0 %v163
    %319 = vmatprep.subr.mxu0 %v172
    %320 = vmatpush1.msra.mxu0 %v171
    %321 = vmatprep.subr.mxu0 %v180
    %322 = vmatpush1.msra.mxu0 %v179
    %323 = vmatprep.subr.mxu0 %v188
    %324 = vmatpush1.msra.mxu0 %v187
    %325 = vmatprep.subr.mxu0 %v196
    %326 = vmatpush1.msra.mxu0 %v195
    %327 = vmatprep.subr.mxu0 %v204
    %328 = vmatpush1.msra.mxu0 %v203
    %329 = vmatprep.subr.mxu0 %v212
    %330 = vmatpush1.msra.mxu0 %v211
    %331 = vmatprep.subr.mxu0 %v220
    %332 = vmatpush1.msra.mxu0 %v219
    %333 = vmatprep.subr.mxu0 %v228
    %334 = vmatpush1.msra.mxu0 %v227
    %335 = vmatprep.subr.mxu0 %v236
    %336 = vmatpush1.msra.mxu0 %v235
    %337 = vmatprep.subr.mxu0 %v244
    %338 = vmatpush1.msra.mxu0 %v243
    %339 = vmatprep.subr.mxu0 %v252
    %340 = vmatpush1.msra.mxu0 %v251
    %341 = vmatprep.subr.mxu0 %v260
    %342 = vmatpush1.msra.mxu0 %v259
    %343 = vmatprep.subr.mxu0 %v268
    %344 = vmatpush1.msra.mxu0 %v267
    %345 = vmatprep.subr.mxu0 %v276
    %346 = vmatpush1.msra.mxu0 %v275
    %347 = vmatprep.mubr.f32.mxu0 %v26
    %348 = vmatmul.mubr.f32.gmra.mrb[0].mxu0 %v25
    %v349 = vpop.f32.mrb[0].mxu0
    %v350 = vadd.f32 0.0, %v349
    %v351 = vpop.f32.mrb[0].mxu0
    %v352 = vadd.f32 0.0, %v351
    %353 = vdwg.mxu0
    %354 = vmatprep.subr.mxu0 %v30
    %355 = vmatpush1.msra.mxu0 %v29
    %356 = vmatprep.subr.mxu0 %v38
    %357 = vmatpush1.msra.mxu0 %v37
    %358 = vmatprep.subr.mxu0 %v46
    %359 = vmatpush1.msra.mxu0 %v45
    %360 = vmatprep.subr.mxu0 %v54
    %361 = vmatpush1.msra.mxu0 %v53
    %362 = vmatprep.subr.mxu0 %v62
    %363 = vmatpush1.msra.mxu0 %v61
    %364 = vmatprep.subr.mxu0 %v70
    %365 = vmatpush1.msra.mxu0 %v69
    %366 = vmatprep.subr.mxu0 %v78
    %367 = vmatpush1.msra.mxu0 %v77
    %368 = vmatprep.subr.mxu0 %v86
    %369 = vmatpush1.msra.mxu0 %v85
    %370 = vmatprep.subr.mxu0 %v94
    %371 = vmatpush1.msra.mxu0 %v93
    %372 = vmatprep.subr.mxu0 %v102
    %373 = vmatpush1.msra.mxu0 %v101
    %374 = vmatprep.subr.mxu0 %v110
    %375 = vmatpush1.msra.mxu0 %v109
    %376 = vmatprep.subr.mxu0 %v118
    %377 = vmatpush1.msra.mxu0 %v117
    %378 = vmatprep.subr.mxu0 %v126
    %379 = vmatpush1.msra.mxu0 %v125
    %380 = vmatprep.subr.mxu0 %v134
    %381 = vmatpush1.msra.mxu0 %v133
    %382 = vmatprep.subr.mxu0 %v142
    %383 = vmatpush1.msra.mxu0 %v141
    %384 = vmatprep.subr.mxu0 %v150
    %385 = vmatpush1.msra.mxu0 %v149
    %386 = vmatprep.subr.mxu0 %v158
    %387 = vmatpush1.msra.mxu0 %v157
    %388 = vmatprep.subr.mxu0 %v166
    %389 = vmatpush1.msra.mxu0 %v165
    %390 = vmatprep.subr.mxu0 %v174
    %391 = vmatpush1.msra.mxu0 %v173
    %392 = vmatprep.subr.mxu0 %v182
    %393 = vmatpush1.msra.mxu0 %v181
    %394 = vmatprep.subr.mxu0 %v190
    %395 = vmatpush1.msra.mxu0 %v189
    %396 = vmatprep.subr.mxu0 %v198
    %397 = vmatpush1.msra.mxu0 %v197
    %398 = vmatprep.subr.mxu0 %v206
    %399 = vmatpush1.msra.mxu0 %v205
    %400 = vmatprep.subr.mxu0 %v214
    %401 = vmatpush1.msra.mxu0 %v213
    %402 = vmatprep.subr.mxu0 %v222
    %403 = vmatpush1.msra.mxu0 %v221
    %404 = vmatprep.subr.mxu0 %v230
    %405 = vmatpush1.msra.mxu0 %v229
    %406 = vmatprep.subr.mxu0 %v238
    %407 = vmatpush1.msra.mxu0 %v237
    %408 = vmatprep.subr.mxu0 %v246
    %409 = vmatpush1.msra.mxu0 %v245
    %410 = vmatprep.subr.mxu0 %v254
    %411 = vmatpush1.msra.mxu0 %v253
    %412 = vmatprep.subr.mxu0 %v262
    %413 = vmatpush1.msra.mxu0 %v261
    %414 = vmatprep.subr.mxu0 %v270
    %415 = vmatpush1.msra.mxu0 %v269
    %416 = vmatprep.subr.mxu0 %v278
    %417 = vmatpush1.msra.mxu0 %v277
    %418 = vmatprep.mubr.f32.mxu0 %v26
    %419 = vmatmul.mubr.f32.gmra.mrb[0].mxu0 %v25
    %v420 = vpop.f32.mrb[0].mxu0
    %v421 = vadd.f32 0.0, %v420
    %v422 = vpop.f32.mrb[0].mxu0
    %v423 = vadd.f32 0.0, %v422
    %424 = vdwg.mxu0
    %425 = vmatprep.subr.mxu0 %v32
    %426 = vmatpush1.msra.mxu0 %v31
    %427 = vmatprep.subr.mxu0 %v40
    %428 = vmatpush1.msra.mxu0 %v39
    %429 = vmatprep.subr.mxu0 %v48
    %430 = vmatpush1.msra.mxu0 %v47
    %431 = vmatprep.subr.mxu0 %v56
    %432 = vmatpush1.msra.mxu0 %v55
    %433 = vmatprep.subr.mxu0 %v64
    %434 = vmatpush1.msra.mxu0 %v63
    %435 = vmatprep.subr.mxu0 %v72
    %436 = vmatpush1.msra.mxu0 %v71
    %437 = vmatprep.subr.mxu0 %v80
    %438 = vmatpush1.msra.mxu0 %v79
    %439 = vmatprep.subr.mxu0 %v88
    %440 = vmatpush1.msra.mxu0 %v87
    %441 = vmatprep.subr.mxu0 %v96
    %442 = vmatpush1.msra.mxu0 %v95
    %443 = vmatprep.subr.mxu0 %v104
    %444 = vmatpush1.msra.mxu0 %v103
    %445 = vmatprep.subr.mxu0 %v112
    %446 = vmatpush1.msra.mxu0 %v111
    %447 = vmatprep.subr.mxu0 %v120
    %448 = vmatpush1.msra.mxu0 %v119
    %449 = vmatprep.subr.mxu0 %v128
    %450 = vmatpush1.msra.mxu0 %v127
    %451 = vmatprep.subr.mxu0 %v136
    %452 = vmatpush1.msra.mxu0 %v135
    %453 = vmatprep.subr.mxu0 %v144
    %454 = vmatpush1.msra.mxu0 %v143
    %455 = vmatprep.subr.mxu0 %v152
    %456 = vmatpush1.msra.mxu0 %v151
    %457 = vmatprep.subr.mxu0 %v160
    %458 = vmatpush1.msra.mxu0 %v159
    %459 = vmatprep.subr.mxu0 %v168
    %460 = vmatpush1.msra.mxu0 %v167
    %461 = vmatprep.subr.mxu0 %v176
    %462 = vmatpush1.msra.mxu0 %v175
    %463 = vmatprep.subr.mxu0 %v184
    %464 = vmatpush1.msra.mxu0 %v183
    %465 = vmatprep.subr.mxu0 %v192
    %466 = vmatpush1.msra.mxu0 %v191
    %467 = vmatprep.subr.mxu0 %v200
    %468 = vmatpush1.msra.mxu0 %v199
    %469 = vmatprep.subr.mxu0 %v208
    %470 = vmatpush1.msra.mxu0 %v207
    %471 = vmatprep.subr.mxu0 %v216
    %472 = vmatpush1.msra.mxu0 %v215
    %473 = vmatprep.subr.mxu0 %v224
    %474 = vmatpush1.msra.mxu0 %v223
    %475 = vmatprep.subr.mxu0 %v232
    %476 = vmatpush1.msra.mxu0 %v231
    %477 = vmatprep.subr.mxu0 %v240
    %478 = vmatpush1.msra.mxu0 %v239
    %479 = vmatprep.subr.mxu0 %v248
    %480 = vmatpush1.msra.mxu0 %v247
    %481 = vmatprep.subr.mxu0 %v256
    %482 = vmatpush1.msra.mxu0 %v255
    %483 = vmatprep.subr.mxu0 %v264
    %484 = vmatpush1.msra.mxu0 %v263
    %485 = vmatprep.subr.mxu0 %v272
    %486 = vmatpush1.msra.mxu0 %v271
    %487 = vmatprep.subr.mxu0 %v280
    %488 = vmatpush1.msra.mxu0 %v279
    %489 = vmatprep.mubr.f32.mxu0 %v26
    %490 = vmatmul.mubr.f32.gmra.mrb[0].mxu0 %v25
    %v491 = vpop.f32.mrb[0].mxu0
    %v492 = vadd.f32 0.0, %v491
    %v493 = vpop.f32.mrb[0].mxu0
    %v494 = vadd.f32 0.0, %v493
    %495 = vdwg.mxu0
    %496 = vmatprep.subr.mxu0 %v34
    %497 = vmatpush1.msra.mxu0 %v33
    %498 = vmatprep.subr.mxu0 %v42
    %499 = vmatpush1.msra.mxu0 %v41
    %500 = vmatprep.subr.mxu0 %v50
    %501 = vmatpush1.msra.mxu0 %v49
    %502 = vmatprep.subr.mxu0 %v58
    %503 = vmatpush1.msra.mxu0 %v57
    %504 = vmatprep.subr.mxu0 %v66
    %505 = vmatpush1.msra.mxu0 %v65
    %506 = vmatprep.subr.mxu0 %v74
    %507 = vmatpush1.msra.mxu0 %v73
    %508 = vmatprep.subr.mxu0 %v82
    %509 = vmatpush1.msra.mxu0 %v81
    %510 = vmatprep.subr.mxu0 %v90
    %511 = vmatpush1.msra.mxu0 %v89
    %512 = vmatprep.subr.mxu0 %v98
    %513 = vmatpush1.msra.mxu0 %v97
    %514 = vmatprep.subr.mxu0 %v106
    %515 = vmatpush1.msra.mxu0 %v105
    %516 = vmatprep.subr.mxu0 %v114
    %517 = vmatpush1.msra.mxu0 %v113
    %518 = vmatprep.subr.mxu0 %v122
    %519 = vmatpush1.msra.mxu0 %v121
    %520 = vmatprep.subr.mxu0 %v130
    %521 = vmatpush1.msra.mxu0 %v129
    %522 = vmatprep.subr.mxu0 %v138
    %523 = vmatpush1.msra.mxu0 %v137
    %524 = vmatprep.subr.mxu0 %v146
    %525 = vmatpush1.msra.mxu0 %v145
    %526 = vmatprep.subr.mxu0 %v154
    %527 = vmatpush1.msra.mxu0 %v153
    %528 = vmatprep.subr.mxu0 %v162
    %529 = vmatpush1.msra.mxu0 %v161
    %530 = vmatprep.subr.mxu0 %v170
    %531 = vmatpush1.msra.mxu0 %v169
    %532 = vmatprep.subr.mxu0 %v178
    %533 = vmatpush1.msra.mxu0 %v177
    %534 = vmatprep.subr.mxu0 %v186
    %535 = vmatpush1.msra.mxu0 %v185
    %536 = vmatprep.subr.mxu0 %v194
    %537 = vmatpush1.msra.mxu0 %v193
    %538 = vmatprep.subr.mxu0 %v202
    %539 = vmatpush1.msra.mxu0 %v201
    %540 = vmatprep.subr.mxu0 %v210
    %541 = vmatpush1.msra.mxu0 %v209
    %542 = vmatprep.subr.mxu0 %v218
    %543 = vmatpush1.msra.mxu0 %v217
    %544 = vmatprep.subr.mxu0 %v226
    %545 = vmatpush1.msra.mxu0 %v225
    %546 = vmatprep.subr.mxu0 %v234
    %547 = vmatpush1.msra.mxu0 %v233
    %548 = vmatprep.subr.mxu0 %v242
    %549 = vmatpush1.msra.mxu0 %v241
    %550 = vmatprep.subr.mxu0 %v250
    %551 = vmatpush1.msra.mxu0 %v249
    %552 = vmatprep.subr.mxu0 %v258
    %553 = vmatpush1.msra.mxu0 %v257
    %554 = vmatprep.subr.mxu0 %v266
    %555 = vmatpush1.msra.mxu0 %v265
    %556 = vmatprep.subr.mxu0 %v274
    %557 = vmatpush1.msra.mxu0 %v273
    %558 = vmatprep.subr.mxu0 %v282
    %559 = vmatpush1.msra.mxu0 %v281
    %560 = vmatprep.mubr.f32.mxu0 %v26
    %561 = vmatmul.mubr.f32.gmra.mrb[0].mxu0 %v25
    %v562 = vpop.f32.mrb[0].mxu0
    %v563 = vadd.f32 0.0, %v562
    %v564 = vpop.f32.mrb[0].mxu0
    %v565 = vadd.f32 0.0, %v564
    %566 = vdwg.mxu0
    %567 = vst [vmem:[%s2] sm:$0xff] %v350
    %568 = vst [vmem:[%s2 + $0x8] sm:$0xff] %v352
    %569 = vst [vmem:[%s2 + $0x10] sm:$0xff] %v421
    %570 = vst [vmem:[%s2 + $0x18] sm:$0xff] %v423
    %571 = vst [vmem:[%s2 + $0x20] sm:$0xff] %v492
    %572 = vst [vmem:[%s2 + $0x28] sm:$0xff] %v494
    %573 = vst [vmem:[%s2 + $0x30] sm:$0xff] %v563
    %574 = vst [vmem:[%s2 + $0x38] sm:$0xff] %v565
    // Predicated region
    $region14: #{interpolate.1} parent=1 // pred_check
      _
    $region15: #{interpolate.1} parent=1 // pred_check_branch
      %576 = sbr.rel (0) target = $region17
    $region16: #{interpolate.1} parent=1 // pred_region
      _
    $region17: #{interpolate.1} parent=1 // pred_fallthru
      _
    // Predicated region
    $region18: #{interpolate.1} parent=1 // pred_check
      _
    $region19: #{interpolate.1} parent=1 // pred_check_branch
      %578 = sbr.rel (0) target = $region21
    $region20: #{interpolate.1} parent=1 // pred_region
      _
    $region21: #{interpolate.1} parent=1 // pred_fallthru
      _
    %579 = vsyncpa [#allocation3], 1

</llo_original>
